<compile_context>
chip_gen: v6e
topology: v6e:2x2x1
jax: 0.10.0
libtpu: 0.0.40
codegen_flags: <defaults>
</compile_context>

<pallas_src>
import functools
import math

import jax
import jax.numpy as jnp
from jax.experimental import pallas as pl
from jax.experimental.pallas import tpu as pltpu


# --------------------------------------------------------------------------
# Kernels
# --------------------------------------------------------------------------
def _standardize_rows_kernel(x_ref, o_ref, *, n_elems):
    """Rows-fit path: each (TN, D) tile holds TN whole flattened images."""
    x = x_ref[...].astype(jnp.float32)

    # Per-image mean over the flattened C*H*W axis (multiply by 1/D, no divide).
    mean = jnp.sum(x, axis=1, keepdims=True) * jnp.float32(1.0 / n_elems)   # (TN, 1)
    centered = x - mean                                                      # (TN, D)

    # Unbiased (n-1) variance, matching torch.std(dim=1) default (two-pass form).
    var = jnp.sum(centered * centered, axis=1, keepdims=True) * jnp.float32(
        1.0 / (n_elems - 1))                                                 # (TN, 1)

    # 1 / max(std, std_min) with std_min = 1/sqrt(D)
    #   == min(rsqrt(var), sqrt(D))   (both sides positive; var==0 -> sqrt(D))
    rstd = jnp.minimum(jax.lax.rsqrt(var), jnp.float32(math.sqrt(n_elems)))  # (TN, 1)

    if jnp.dtype(o_ref.dtype).itemsize < 4:
        # Sub-32-bit output: broadcast multiply in the output dtype (bf16 VALU
        # on v6e/v7x); the reductions above stay in f32.
        o_ref[...] = centered.astype(o_ref.dtype) * rstd.astype(o_ref.dtype)
    else:
        o_ref[...] = (centered * rstd).astype(o_ref.dtype)


def _row_stats_kernel(x_ref, mean_ref, rstd_ref, *, n_elems, last_chunk_valid):
    """Chunked-D pass 1: accumulate per-row sum / sum-of-squares over D chunks.

    mean_ref / rstd_ref are (TN, 1) output blocks resident across the D axis;
    they hold the running sum / sum-of-squares and are finalized in place.
    """
    k = pl.program_id(1)
    nk = pl.num_programs(1)

    @pl.when(k == 0)
    def _init():
        mean_ref[...] = jnp.zeros_like(mean_ref)   # running sum(x)
        rstd_ref[...] = jnp.zeros_like(rstd_ref)   # running sum(x*x)

    x = x_ref[...].astype(jnp.float32)

    def _accumulate(xv):
        mean_ref[...] += jnp.sum(xv, axis=1, keepdims=True)
        rstd_ref[...] += jnp.sum(xv * xv, axis=1, keepdims=True)

    if last_chunk_valid is None:
        # D divides evenly into chunks: no masking anywhere.
        _accumulate(x)
    else:
        # Only the ragged last chunk needs masking (out-of-range lanes are
        # undefined on read); keep all other chunks mask-free.
        @pl.when(k < nk - 1)
        def _full():
            _accumulate(x)

        @pl.when(k == nk - 1)
        def _ragged():
            col = jax.lax.broadcasted_iota(jnp.int32, x.shape, 1)
            _accumulate(jnp.where(col < last_chunk_valid, x, 0.0))

    @pl.when(k == nk - 1)
    def _finalize():
        s = mean_ref[...]
        mean = s * jnp.float32(1.0 / n_elems)
        # Single-pass E[x^2] - E[x]^2 variance with the unbiased (n-1) divisor.
        # TODO(synk): for data with |mean| >> std this can cancel; a chunked
        # two-pass (mean pass, then centered pass) would be numerically safer.
        var = (rstd_ref[...] - s * mean) * jnp.float32(1.0 / (n_elems - 1))
        var = jnp.maximum(var, 0.0)
        mean_ref[...] = mean
        rstd_ref[...] = jnp.minimum(jax.lax.rsqrt(var),
                                    jnp.float32(math.sqrt(n_elems)))


def _normalize_kernel(x_ref, mean_ref, rstd_ref, o_ref):
    """Chunked-D pass 2: out = (x - mean) * rstd per (TN, TD) chunk."""
    x = x_ref[...].astype(jnp.float32)
    centered = x - mean_ref[...]
    if jnp.dtype(o_ref.dtype).itemsize < 4:
        o_ref[...] = centered.astype(o_ref.dtype) * mean_ref[...].astype(o_ref.dtype) * 0 \
            + centered.astype(o_ref.dtype) * rstd_ref[...].astype(o_ref.dtype) \
            if False else centered.astype(o_ref.dtype) * rstd_ref[...].astype(o_ref.dtype)
    else:
        o_ref[...] = (centered * rstd_ref[...]).astype(o_ref.dtype)


# --------------------------------------------------------------------------
# Tiling plan (generation-aware)
# --------------------------------------------------------------------------
def _vmem_capacity_bytes():
    try:
        return int(pltpu.get_tpu_info().vmem_capacity_bytes)
    except Exception:
        # Conservative fallback (v7x per-TensorCore VMEM); safe on every chip.
        return 64 * 1024 * 1024


def _sublane(dtype):
    return 16 if jnp.dtype(dtype).itemsize < 4 else 8


def _plan(n, d, dtype):
    """Returns (mode, tn, td, vmem_limit); mode in {"single", "chunked"}."""
    vmem = _vmem_capacity_bytes()
    vmem_limit = (vmem * 3) // 4            # 96 MiB on v5e/v6e, 48 MiB on v7x
    target = vmem // 10                     # f32 compute-tile target (~12.8 / 6.4 MiB)
    sub = _sublane(dtype)
    row_f32_bytes = d * 4

    if sub * row_f32_bytes <= target:
        # Whole rows fit comfortably: tile the batch axis only.
        tn = (target // row_f32_bytes) // sub * sub
        if tn >= n:
            tn = n
            # Avoid a degenerate single-step grid (no DMA/compute overlap) for
            # mid-sized problems: keep >= ~4 sublane-aligned steps.
            if n >= 4 * sub and n * row_f32_bytes > (2 << 20):
                tn = max(sub, (-(-n // 4)) // sub * sub)
        return "single", tn, None, vmem_limit

    # Large images: a whole row does not fit a reasonable tile -> split D.
    tn = min(sub, n)
    td = max(128, (target // (tn * 4)) // 128 * 128)
    td = min(td, d)
    return "chunked", tn, td, vmem_limit


# --------------------------------------------------------------------------
# Public wrapper
# --------------------------------------------------------------------------
def per_image_standardize(x, *, _force_chunk_td=None):
    """x: (N, C, H, W). Returns (x - mean_b) / max(std_b, 1/sqrt(CHW)) per image."""
    assert x.ndim == 4, "expected NCHW input"
    n = int(x.shape[0])
    d = int(x.shape[1] * x.shape[2] * x.shape[3])
    assert d > 1, "per-image std requires at least 2 elements per image"

    # Flatten each image to a row (row-major, same element order as torch .view(N,-1)).
    x2 = x.reshape(n, d)

    mode, tn, td, vmem_limit = _plan(n, d, x.dtype)
    if _force_chunk_td is not None:          # test hook: force the D-split path
        mode, tn, td = "chunked", min(_sublane(x.dtype), n), int(_force_chunk_td)

    if mode == "single":
        out2 = pl.pallas_call(
            functools.partial(_standardize_rows_kernel, n_elems=d),
            out_shape=jax.ShapeDtypeStruct((n, d), x.dtype),
            grid_spec=pl.GridSpec(
                grid=(pl.cdiv(n, tn),),
                in_specs=[pl.BlockSpec((tn, d), lambda i: (i, 0))],
                out_specs=pl.BlockSpec((tn, d), lambda i: (i, 0)),
            ),
            compiler_params=pltpu.CompilerParams(
                # Rows are independent -> shard the batch-tile axis across
                # TensorCores on v7x; harmless on v5e/v6e.
                dimension_semantics=("parallel",),
                vmem_limit_bytes=vmem_limit,
            ),
        )(x2)
        return out2.reshape(x.shape)

    # ---- chunked-D (large image) path: stats pass + normalize pass ----
    rem = d % td
    grid = (pl.cdiv(n, tn), pl.cdiv(d, td))

    mean, rstd = pl.pallas_call(
        functools.partial(_row_stats_kernel, n_elems=d,
                          last_chunk_valid=(rem if rem else None)),
        out_shape=(jax.ShapeDtypeStruct((n, 1), jnp.float32),
                   jax.ShapeDtypeStruct((n, 1), jnp.float32)),
        grid_spec=pl.GridSpec(
            grid=grid,
            in_specs=[pl.BlockSpec((tn, td), lambda i, k: (i, k))],
            out_specs=(pl.BlockSpec((tn, 1), lambda i, k: (i, 0)),
                       pl.BlockSpec((tn, 1), lambda i, k: (i, 0))),
        ),
        compiler_params=pltpu.CompilerParams(
            dimension_semantics=("parallel", "arbitrary"),
            vmem_limit_bytes=vmem_limit,
        ),
    )(x2)

    out2 = pl.pallas_call(
        _normalize_kernel,
        out_shape=jax.ShapeDtypeStruct((n, d), x.dtype),
        grid_spec=pl.GridSpec(
            grid=grid,
            in_specs=[pl.BlockSpec((tn, td), lambda i, k: (i, k)),
                      pl.BlockSpec((tn, 1), lambda i, k: (i, 0)),
                      pl.BlockSpec((tn, 1), lambda i, k: (i, 0))],
            out_specs=pl.BlockSpec((tn, td), lambda i, k: (i, k)),
        ),
        compiler_params=pltpu.CompilerParams(
            dimension_semantics=("parallel", "parallel"),
            vmem_limit_bytes=vmem_limit,
        ),
    )(x2, mean, rstd)

    return out2.reshape(x.shape)


# --------------------------------------------------------------------------
# Reference + tests
# --------------------------------------------------------------------------
def _reference(x):
    n = x.shape[0]
    d = x.size // n
    xf = x.reshape(n, -1).astype(jnp.float32)
    mean = xf.mean(axis=1, keepdims=True)
    var = ((xf - mean) ** 2).sum(axis=1, keepdims=True) / (d - 1)
    std = jnp.sqrt(var)
    std_min = 1.0 / jnp.sqrt(jnp.float32(d))
    std_adj = jnp.maximum(std, std_min)
    return ((xf - mean) / std_adj).reshape(x.shape).astype(x.dtype)


if __name__ == "__main__":
    key = jax.random.PRNGKey(0)
    k1, k2, k3, k4 = jax.random.split(key, 4)

    # 1) Small f32 NCHW batch -- rows-fit path.
    x = jax.random.normal(k1, (2, 4, 16, 16), dtype=jnp.float32)
    out = jax.block_until_ready(per_image_standardize(x))
    ref = _reference(x)
    assert out.shape == x.shape and out.dtype == x.dtype
    assert jnp.allclose(out, ref, atol=1e-5, rtol=1e-5), "mismatch (f32 single path)"

    # 2) Larger batch with a constant image (hits the std_min floor).
    x2 = jax.random.normal(k2, (10, 3, 8, 8), dtype=jnp.float32)
    x2 = x2.at[3].set(0.5)  # constant image -> std == 0 -> uses std_min
    out2 = jax.block_until_ready(per_image_standardize(x2))
    assert jnp.allclose(out2, _reference(x2), atol=1e-5, rtol=1e-5), \
        "mismatch (std_min path)"

    # 3) Chunked-D (large-image) path forced at a small shape, with a ragged
    #    last D chunk (d = 300 is not a multiple of td = 128).
    x3 = jax.random.normal(k3, (4, 3, 10, 10), dtype=jnp.float32)
    out3 = jax.block_until_ready(per_image_standardize(x3, _force_chunk_td=128))
    assert jnp.allclose(out3, _reference(x3), atol=1e-4, rtol=1e-4), \
        "mismatch (chunked-D path)"

    # 4) bf16 I/O exercising the low-precision final-multiply path.
    x4 = jax.random.normal(k4, (2, 4, 16, 16), dtype=jnp.bfloat16)
    out4 = jax.block_until_ready(per_image_standardize(x4))
    ref4 = _reference(x4).astype(jnp.float32)
    assert out4.dtype == jnp.bfloat16
    assert jnp.allclose(out4.astype(jnp.float32), ref4, atol=5e-2, rtol=5e-2), \
        "mismatch (bf16 path)"

    print("KERNEL_OK")
</pallas_src>

<mosaic_0001>
module attributes {stable_mosaic.version = 11 : i64} {
  func.func @_standardize_rows_kernel(%arg0: i32, %arg1: memref<2x1024xf32, #tpu.memory_space<vmem>>, %arg2: memref<2x1024xf32, #tpu.memory_space<vmem>>) attributes {dimension_semantics = [#tpu.dimension_semantics<parallel>], iteration_bounds = array<i64: 1>, scalar_prefetch = 0 : i64, scratch_operands = 0 : i64, tpu.core_type = #tpu.core_type<tc>, window_params = [{transform_indices = @transform_0, window_bounds = array<i64: 2, 1024>}, {transform_indices = @transform_1, window_bounds = array<i64: 2, 1024>}]} {
    %c0 = arith.constant 0 : index
    %c0_0 = arith.constant 0 : index
    %0 = vector.load %arg1[%c0, %c0_0] : memref<2x1024xf32, #tpu.memory_space<vmem>>, vector<2x1024xf32>
    %cst = arith.constant dense<0.000000e+00> : vector<2xf32>
    %1 = vector.multi_reduction <add>, %0, %cst [1] : vector<2x1024xf32> to vector<2xf32>
    %2 = vector.shape_cast %1 : vector<2xf32> to vector<2x1xf32>
    %cst_1 = arith.constant 9.765625E-4 : f32
    %3 = vector.broadcast %cst_1 : f32 to vector<2x1xf32>
    %4 = arith.mulf %2, %3 : vector<2x1xf32>
    %5 = vector.broadcast %4 : vector<2x1xf32> to vector<2x1024xf32>
    %6 = arith.subf %0, %5 : vector<2x1024xf32>
    %7 = arith.mulf %6, %6 : vector<2x1024xf32>
    %cst_2 = arith.constant dense<0.000000e+00> : vector<2xf32>
    %8 = vector.multi_reduction <add>, %7, %cst_2 [1] : vector<2x1024xf32> to vector<2xf32>
    %9 = vector.shape_cast %8 : vector<2xf32> to vector<2x1xf32>
    %cst_3 = arith.constant 9.77517105E-4 : f32
    %10 = vector.broadcast %cst_3 : f32 to vector<2x1xf32>
    %11 = arith.mulf %9, %10 : vector<2x1xf32>
    %12 = math.rsqrt %11 : vector<2x1xf32>
    %cst_4 = arith.constant 3.200000e+01 : f32
    %13 = vector.broadcast %cst_4 : f32 to vector<2x1xf32>
    %14 = arith.minimumf %12, %13 : vector<2x1xf32>
    %15 = vector.broadcast %14 : vector<2x1xf32> to vector<2x1024xf32>
    %16 = arith.mulf %6, %15 : vector<2x1024xf32>
    %c0_5 = arith.constant 0 : index
    %c0_6 = arith.constant 0 : index
    %17 = vector.load %arg2[%c0_5, %c0_6] : memref<2x1024xf32, #tpu.memory_space<vmem>>, vector<2x1024xf32>
    tpu.vector_store %arg2[%c0_5, %c0_6], %16 {strides = array<i32>} : memref<2x1024xf32, #tpu.memory_space<vmem>>, vector<2x1024xf32>,
    return
  }
  func.func @transform_0(%arg0: i32) -> (i32, i32) {
    %c0_i32 = arith.constant 0 : i32
    %c0_i32_0 = arith.constant 0 : i32
    return %arg0, %c0_i32 : i32, i32
  }
  func.func @transform_1(%arg0: i32) -> (i32, i32) {
    %c0_i32 = arith.constant 0 : i32
    %c0_i32_0 = arith.constant 0 : i32
    return %arg0, %c0_i32 : i32, i32
  }
}

</mosaic_0001>

<llo_original>
// kernel: tpu_custom_call.1
$region0: #{tpu_custom_call.1}
  #allocation0 [shape = 'u32[]', space=smem, size = 0x4, offset = 0x4, fixed_abs, tag = 'smem constant byte address 0x4 - core index']
  #allocation1 [shape = 'u32[144,128]{1,0:T(1,128)}', space=vmem, size = 0x12000, scoped, tag = 'internal scratch']
  %s0 = inlined_call_operand.hbm [shape: f32[2,1024], index: 0, kind: input, shape index: {}]
  %s1 = inlined_call_operand.hbm [shape: f32[2,1024], index: 1, kind: output, shape index: {}]
  %s2 = sld [smem:[#allocation0]]
  $region18: #{tpu_custom_call.1} parent=0
    _
  %s4 = ssub.s32 1, %s2
  %s5 = scalar_select 0, %s4, %s2
  $region1: #{tpu_custom_call.1} parent=0
    #allocation2 [shape = 'u8[8192]{0}', space=vmem, size = 0x2000, scoped, tag = 'input window, operand 0, single buffered']
    #allocation3 [shape = 's32[1]{0}', space=sflag, size = 0x4, scoped, tag = 'scoped memory for tpu_custom_call.1']
    #allocation4 [shape = 's32[1]{0}', space=sflag, size = 0x4, scoped, tag = 'scoped memory for tpu_custom_call.1']
    #allocation5 [shape = 'u8[8192]{0}', space=vmem, size = 0x2000, scoped, tag = 'output window, operand 0, single buffered']
    %6 = vsyncpa [#allocation3], 0
    %7 = vsyncpa [#allocation4], 0
    // Predicated region
    $region2: #{tpu_custom_call.1} parent=1 // pred_check
      _
    $region3: #{tpu_custom_call.1} parent=1 // pred_check_branch
      %9 = sbr.rel (0) target = $region5
    $region4: #{tpu_custom_call.1} parent=1 // pred_region
      %s11 = ssub.s32 256, 256
      %12 = vsyncadd [#allocation3], %s11
      %s14 = sshll.u32 [#allocation2], 4
      %s15 = int_to_ptr.vmem [resolvable:$true] %s14
      %17 = dma.hbm_to_vmem [thread:$0]  %s0, 256, %s15, [#allocation3]
    $region5: #{tpu_custom_call.1} parent=1 // pred_fallthru
      _
    // Predicated region
    $region6: #{tpu_custom_call.1} parent=1 // pred_check
      _
    $region7: #{tpu_custom_call.1} parent=1 // pred_check_branch
      %19 = sbr.rel (0) target = $region9
    $region8: #{tpu_custom_call.1} parent=1 // pred_region
      %20 = dma.done [#allocation3], 256
    $region9: #{tpu_custom_call.1} parent=1 // pred_fallthru
      _
    %v21 = vld [vmem:[#allocation2] sm:$0xff]
    %v22 = vld [vmem:[#allocation2 + $0x8] sm:$0xff]
    %v25 = vcombine.high %v21, %v21
    %v27 = vunpack.c.l.s4 1983009808
    %v28 = vunpack.c.0.s8 %v27
    %v29 = vlaneseq
    %v30 = vshrl.u32 %v29, 7
    %v31 = vsub.s32 %v28, %v30
    %v32 = vrot.slane %v21, %v31
    %v34 = vunpack.c.l.s4 1983009808
    %v35 = vunpack.c.0.s8 %v34
    %v36 = vlaneseq
    %v37 = vshrl.u32 %v36, 7
    %v38 = vsub.s32 %v35, %v37
    %v39 = vrot.slane %v25, %v38
    %v40 = vcombine.high %v32, %v32
    %v41 = vcombine.high %v39, %v39
    %v42 = vcombine.high %v22, %v22
    %v44 = vunpack.c.l.s4 1983009808
    %v45 = vunpack.c.0.s8 %v44
    %v46 = vlaneseq
    %v47 = vshrl.u32 %v46, 7
    %v48 = vsub.s32 %v45, %v47
    %v49 = vrot.slane %v22, %v48
    %v51 = vunpack.c.l.s4 1983009808
    %v52 = vunpack.c.0.s8 %v51
    %v53 = vlaneseq
    %v54 = vshrl.u32 %v53, 7
    %v55 = vsub.s32 %v52, %v54
    %v56 = vrot.slane %v42, %v55
    %v57 = vcombine.high %v49, %v49
    %v58 = vcombine.high %v56, %v56
    %vm67 = vcmask 1041408
    %v68 = vsel %vm67, %v32, 0.0
    %v69 = vsel %vm67, %v40, 0.0
    %v70 = vadd.f32 %v68, %v69
    %v71 = vsel %vm67, %v39, 0.0
    %v72 = vadd.f32 %v70, %v71
    %v73 = vsel %vm67, %v41, 0.0
    %v74 = vadd.f32 %v72, %v73
    %v75 = vsel %vm67, %v49, 0.0
    %v76 = vadd.f32 %v74, %v75
    %v77 = vsel %vm67, %v57, 0.0
    %v78 = vadd.f32 %v76, %v77
    %v79 = vsel %vm67, %v56, 0.0
    %v80 = vadd.f32 %v78, %v79
    %v81 = vsel %vm67, %v58, 0.0
    %v82 = vadd.f32 %v80, %v81
    %83 = vadd.xlane.f32.xlu0 %v82
    %v84 = vpop.xlane.xlu0 %83
    %v85 = vmul.f32 %v84, 0.0009765625
    %v88 = vunpack.c.l.s4 269488144
    %v89 = vunpack.c.0.s8 %v88
    %v90 = vlaneseq
    %v91 = vshrl.u32 %v90, 7
    %v92 = vsub.s32 %v89, %v91
    %v93 = vrot.slane %v85, %v92
    %v95 = vsub.f32 %v21, %v93
    %v96 = vsub.f32 %v22, %v93
    %v97 = vmul.f32 %v95, %v95
    %v98 = vmul.f32 %v96, %v96
    %v101 = vcombine.high %v97, %v97
    %v103 = vunpack.c.l.s4 1983009808
    %v104 = vunpack.c.0.s8 %v103
    %v105 = vlaneseq
    %v106 = vshrl.u32 %v105, 7
    %v107 = vsub.s32 %v104, %v106
    %v108 = vrot.slane %v97, %v107
    %v110 = vunpack.c.l.s4 1983009808
    %v111 = vunpack.c.0.s8 %v110
    %v112 = vlaneseq
    %v113 = vshrl.u32 %v112, 7
    %v114 = vsub.s32 %v111, %v113
    %v115 = vrot.slane %v101, %v114
    %v116 = vcombine.high %v108, %v108
    %v117 = vcombine.high %v115, %v115
    %v118 = vcombine.high %v98, %v98
    %v120 = vunpack.c.l.s4 1983009808
    %v121 = vunpack.c.0.s8 %v120
    %v122 = vlaneseq
    %v123 = vshrl.u32 %v122, 7
    %v124 = vsub.s32 %v121, %v123
    %v125 = vrot.slane %v98, %v124
    %v127 = vunpack.c.l.s4 1983009808
    %v128 = vunpack.c.0.s8 %v127
    %v129 = vlaneseq
    %v130 = vshrl.u32 %v129, 7
    %v131 = vsub.s32 %v128, %v130
    %v132 = vrot.slane %v118, %v131
    %v133 = vcombine.high %v125, %v125
    %v134 = vcombine.high %v132, %v132
    %v143 = vsel %vm67, %v108, 0.0
    %v144 = vsel %vm67, %v116, 0.0
    %v145 = vadd.f32 %v143, %v144
    %v146 = vsel %vm67, %v115, 0.0
    %v147 = vadd.f32 %v145, %v146
    %v148 = vsel %vm67, %v117, 0.0
    %v149 = vadd.f32 %v147, %v148
    %v150 = vsel %vm67, %v125, 0.0
    %v151 = vadd.f32 %v149, %v150
    %v152 = vsel %vm67, %v133, 0.0
    %v153 = vadd.f32 %v151, %v152
    %v154 = vsel %vm67, %v132, 0.0
    %v155 = vadd.f32 %v153, %v154
    %v156 = vsel %vm67, %v134, 0.0
    %v157 = vadd.f32 %v155, %v156
    %158 = vadd.xlane.f32.xlu0 %v157
    %v159 = vpop.xlane.xlu0 %158
    %v160 = vmul.f32 %v159, 0.0009775171
    %v161 = vrsqrt.pop %v160
    %v162 = vmin.f32 %v161, 32.0
    %v165 = vunpack.c.l.s4 269488144
    %v166 = vunpack.c.0.s8 %v165
    %v167 = vlaneseq
    %v168 = vshrl.u32 %v167, 7
    %v169 = vsub.s32 %v166, %v168
    %v170 = vrot.slane %v162, %v169
    %v172 = vmul.f32 %v95, %v170
    %v173 = vmul.f32 %v96, %v170
    %174 = vst [vmem:[#allocation5] sm:$0xff] %v172
    %175 = vst [vmem:[#allocation5 + $0x8] sm:$0xff] %v173
    // Predicated region
    $region10: #{tpu_custom_call.1} parent=1 // pred_check
      _
    $region11: #{tpu_custom_call.1} parent=1 // pred_check_branch
      %177 = sbr.rel (0) target = $region13
    $region12: #{tpu_custom_call.1} parent=1 // pred_region
      %s179 = ssub.s32 256, 256
      %180 = vsyncadd [#allocation4], %s179
      %s182 = sshll.u32 [#allocation5], 4
      %s183 = int_to_ptr.vmem [resolvable:$true] %s182
      %185 = dma.vmem_to_hbm [thread:$0]  %s183, 256, %s1, [#allocation4]
    $region13: #{tpu_custom_call.1} parent=1 // pred_fallthru
      _
    // Predicated region
    $region14: #{tpu_custom_call.1} parent=1 // pred_check
      _
    $region15: #{tpu_custom_call.1} parent=1 // pred_check_branch
      %187 = sbr.rel (0) target = $region17
    $region16: #{tpu_custom_call.1} parent=1 // pred_region
      %188 = dma.done [#allocation4], 256
    $region17: #{tpu_custom_call.1} parent=1 // pred_fallthru
      _
    %189 = vsyncpa [#allocation3], 1
    %190 = vsyncpa [#allocation4], 1

</llo_original>
